<compile_context>
chip_gen: v7x
topology: tpu7x:2x2x1
jax: 0.10.0
libtpu: 0.0.40
codegen_flags: <defaults>
</compile_context>

<pallas_src>
import jax
import jax.numpy as jnp
from jax.experimental import pallas as pl
from jax.experimental.pallas import tpu as pltpu


def _round_up(x, m):
    return ((x + m - 1) // m) * m


def attn_net_kernel(x_ref, w1_ref, b1_ref, w2_ref, b2_ref, o_ref):
    """One row-tile per grid step: (tm, L) -> (tm, C). Fully fused MLP head.

    Inputs arrive already in the compute dtype (bf16 by default), so the DMAs move
    the narrow type and the kernel does no re-casting of x/w1/w2.
    """
    # Linear(L, D): MXU matmul with f32 accumulation, f32 bias add.
    h = jnp.dot(x_ref[...], w1_ref[...], preferred_element_type=jnp.float32) + b1_ref[...]
    # Tanh on the EUP; on the bf16 path this is a bf16 tanh (faster EUP path on
    # v6e/v7x) and also the dtype the second MXU matmul wants.
    h = jnp.tanh(h.astype(w2_ref.dtype))
    # Linear(D, n_classes): f32 accumulate + f32 bias, slim (tm, C) store.
    o_ref[...] = jnp.dot(h, w2_ref[...], preferred_element_type=jnp.float32) + b2_ref[...]


def _pick_row_tile(n_rows, row_tile):
    tm = min(row_tile, _round_up(n_rows, 8))
    # Guarantee >=2 grid steps when the bag can be split, so both v7x TensorCores
    # (megacore 'parallel' sharding) get work; costs ~0.35us extra on 1-TC chips.
    half = _round_up(pl.cdiv(n_rows, 2), 8)
    if half < tm:
        tm = half
    return max(tm, 8)


def attn_net_forward(x, params, *, row_tile=1024, use_bf16=True):
    """Replicates Attn_Net.forward: returns (A, x).

    params: dict with
      w1: (L, D)   b1: (1, D)   w2: (D, n_classes)   b2: (1, n_classes)
    (weights stored in (in, out) layout, i.e. already transposed vs torch.nn.Linear)
    """
    orig_x = x
    lead_shape = x.shape[:-1]
    L = x.shape[-1]
    x2 = x.reshape(-1, L)                      # PyTorch Linear folds leading dims
    N = x2.shape[0]
    D = params["w1"].shape[1]
    C = params["w2"].shape[1]

    # Compute dtype at the DMA boundary (wrapper-side cast, not in-kernel).
    cdt = jnp.bfloat16 if use_bf16 else jnp.float32
    x_c = x2 if x2.dtype == cdt else x2.astype(cdt)
    w1 = params["w1"].astype(cdt)
    w2 = params["w2"].astype(cdt)
    b1 = params["b1"].astype(jnp.float32)
    b2 = params["b2"].astype(jnp.float32)

    tm = _pick_row_tile(N, row_tile)
    grid = (pl.cdiv(N, tm),)                   # ragged last tile, no jnp.pad copy of x

    const = lambda shape: pl.BlockSpec(shape, lambda i, _n=len(shape): (0,) * _n)

    A = pl.pallas_call(
        attn_net_kernel,
        out_shape=jax.ShapeDtypeStruct((N, C), jnp.float32),
        grid=grid,
        in_specs=[
            pl.BlockSpec((tm, L), lambda i: (i, 0)),   # x row tile (bf16 by default)
            const((L, D)),                             # W1 (VMEM-resident across steps)
            const((1, D)),                             # b1 (f32)
            const((D, C)),                             # W2
            const((1, C)),                             # b2 (f32)
        ],
        out_specs=pl.BlockSpec((tm, C), lambda i: (i, 0)),
        compiler_params=pltpu.CompilerParams(dimension_semantics=("parallel",)),
    )(x_c, w1, b1, w2, b2)

    return A.reshape(*lead_shape, C), orig_x


if __name__ == "__main__":
    # Attn_Net defaults: L=1024, D=256, n_classes=1.
    L, D, C = 1024, 256, 1

    key = jax.random.PRNGKey(0)
    kx, k1, k2, k3, k4, kx2 = jax.random.split(key, 6)
    params = {
        "w1": jax.random.normal(k1, (L, D), jnp.float32) * 0.03,
        "b1": jax.random.normal(k2, (1, D), jnp.float32) * 0.03,
        "w2": jax.random.normal(k3, (D, C), jnp.float32) * 0.03,
        "b2": jax.random.normal(k4, (1, C), jnp.float32) * 0.03,
    }

    def ref(xi):
        return jnp.tanh(xi @ params["w1"] + params["b1"]) @ params["w2"] + params["b2"]

    # Case 1: default bf16 MXU-input path, aligned small bag (N=16 -> 2 row tiles).
    N = 16
    x = jax.random.normal(kx, (N, L), jnp.float32)
    A, x_out = attn_net_forward(x, params)
    A = jax.block_until_ready(A)
    A_ref = ref(x)
    assert A.shape == (N, C), A.shape
    assert x_out.shape == x.shape and jnp.array_equal(x_out, x)
    assert jnp.allclose(A, A_ref, rtol=3e-2, atol=3e-2), float(jnp.max(jnp.abs(A - A_ref)))

    # Case 2: f32 path, unaligned N (exercises the ragged last row tile), tight check.
    N2 = 50
    xb = jax.random.normal(kx2, (N2, L), jnp.float32)
    A2, _ = attn_net_forward(xb, params, use_bf16=False)
    A2 = jax.block_until_ready(A2)
    A2_ref = ref(xb)
    assert A2.shape == (N2, C), A2.shape
    assert jnp.allclose(A2, A2_ref, rtol=2e-3, atol=2e-3), float(jnp.max(jnp.abs(A2 - A2_ref)))

    print("KERNEL_OK")
</pallas_src>

<mosaic_0001>
module attributes {stable_mosaic.version = 11 : i64} {
  func.func @attn_net_kernel(%arg0: i32, %arg1: memref<8x1024xbf16, #tpu.memory_space<vmem>>, %arg2: memref<1024x256xbf16, #tpu.memory_space<vmem>>, %arg3: memref<1x256xf32, #tpu.memory_space<vmem>>, %arg4: memref<256x1xbf16, #tpu.memory_space<vmem>>, %arg5: memref<1x1xf32, #tpu.memory_space<vmem>>, %arg6: memref<8x1xf32, #tpu.memory_space<vmem>>) attributes {dimension_semantics = [#tpu.dimension_semantics<parallel>], iteration_bounds = array<i64: 2>, scalar_prefetch = 0 : i64, scratch_operands = 0 : i64, tpu.core_type = #tpu.core_type<tc>, window_params = [{transform_indices = @transform_0, window_bounds = array<i64: 8, 1024>}, {pipeline_mode = #tpu.pipeline_mode<synchronous>, transform_indices = @transform_1, window_bounds = array<i64: 1024, 256>}, {pipeline_mode = #tpu.pipeline_mode<synchronous>, transform_indices = @transform_2, window_bounds = array<i64: 1, 256>}, {pipeline_mode = #tpu.pipeline_mode<synchronous>, transform_indices = @transform_3, window_bounds = array<i64: 256, 1>}, {pipeline_mode = #tpu.pipeline_mode<synchronous>, transform_indices = @transform_4, window_bounds = array<i64: 1, 1>}, {transform_indices = @transform_5, window_bounds = array<i64: 8, 1>}]} {
    %c0 = arith.constant 0 : index
    %c0_0 = arith.constant 0 : index
    %0 = vector.load %arg1[%c0, %c0_0] : memref<8x1024xbf16, #tpu.memory_space<vmem>>, vector<8x1024xbf16>
    %c0_1 = arith.constant 0 : index
    %c0_2 = arith.constant 0 : index
    %1 = vector.load %arg2[%c0_1, %c0_2] : memref<1024x256xbf16, #tpu.memory_space<vmem>>, vector<1024x256xbf16>
    %cst = arith.constant dense<0.000000e+00> : vector<8x256xf32>
    %2 = tpu.matmul %0, %1, %cst {dimension_numbers = #tpu.dot_dimension_numbers<[1], [0], [0], [1], [0, 0, 1, 1], [], []>} : vector<8x1024xbf16>, vector<1024x256xbf16>, vector<8x256xf32> -> vector<8x256xf32>
    %c0_3 = arith.constant 0 : index
    %c0_4 = arith.constant 0 : index
    %3 = vector.load %arg3[%c0_3, %c0_4] : memref<1x256xf32, #tpu.memory_space<vmem>>, vector<1x256xf32>
    %4 = vector.broadcast %3 : vector<1x256xf32> to vector<8x256xf32>
    %5 = arith.addf %2, %4 : vector<8x256xf32>
    %6 = arith.truncf %5 : vector<8x256xf32> to vector<8x256xbf16>
    %7 = math.tanh %6 : vector<8x256xbf16>
    %c0_5 = arith.constant 0 : index
    %c0_6 = arith.constant 0 : index
    %8 = vector.load %arg4[%c0_5, %c0_6] : memref<256x1xbf16, #tpu.memory_space<vmem>>, vector<256x1xbf16>
    %cst_7 = arith.constant dense<0.000000e+00> : vector<8x1xf32>
    %9 = tpu.matmul %7, %8, %cst_7 {dimension_numbers = #tpu.dot_dimension_numbers<[1], [0], [0], [1], [0, 0, 1, 1], [], []>} : vector<8x256xbf16>, vector<256x1xbf16>, vector<8x1xf32> -> vector<8x1xf32>
    %c0_8 = arith.constant 0 : index
    %c0_9 = arith.constant 0 : index
    %10 = vector.load %arg5[%c0_8, %c0_9] : memref<1x1xf32, #tpu.memory_space<vmem>>, vector<1x1xf32>
    %11 = vector.broadcast %10 : vector<1x1xf32> to vector<8x1xf32>
    %12 = arith.addf %9, %11 : vector<8x1xf32>
    %c0_10 = arith.constant 0 : index
    %c0_11 = arith.constant 0 : index
    %13 = vector.load %arg6[%c0_10, %c0_11] : memref<8x1xf32, #tpu.memory_space<vmem>>, vector<8x1xf32>
    tpu.vector_store %arg6[%c0_10, %c0_11], %12 {strides = array<i32>} : memref<8x1xf32, #tpu.memory_space<vmem>>, vector<8x1xf32>,
    return
  }
  func.func @transform_0(%arg0: i32) -> (i32, i32) {
    %c0_i32 = arith.constant 0 : i32
    %c0_i32_0 = arith.constant 0 : i32
    return %arg0, %c0_i32 : i32, i32
  }
  func.func @transform_1(%arg0: i32) -> (i32, i32) {
    %c0_i32 = arith.constant 0 : i32
    %c0_i32_0 = arith.constant 0 : i32
    %c0_i32_1 = arith.constant 0 : i32
    return %c0_i32, %c0_i32_0 : i32, i32
  }
  func.func @transform_2(%arg0: i32) -> (i32, i32) {
    %c0_i32 = arith.constant 0 : i32
    %c0_i32_0 = arith.constant 0 : i32
    %c0_i32_1 = arith.constant 0 : i32
    return %c0_i32, %c0_i32_0 : i32, i32
  }
  func.func @transform_3(%arg0: i32) -> (i32, i32) {
    %c0_i32 = arith.constant 0 : i32
    %c0_i32_0 = arith.constant 0 : i32
    %c0_i32_1 = arith.constant 0 : i32
    return %c0_i32, %c0_i32_0 : i32, i32
  }
  func.func @transform_4(%arg0: i32) -> (i32, i32) {
    %c0_i32 = arith.constant 0 : i32
    %c0_i32_0 = arith.constant 0 : i32
    %c0_i32_1 = arith.constant 0 : i32
    return %c0_i32, %c0_i32_0 : i32, i32
  }
  func.func @transform_5(%arg0: i32) -> (i32, i32) {
    %c0_i32 = arith.constant 0 : i32
    %c0_i32_0 = arith.constant 0 : i32
    return %arg0, %c0_i32 : i32, i32
  }
}

</mosaic_0001>

<llo_original>
// kernel: tpu_custom_call.1
$region0: #{tpu_custom_call.1}
  #allocation0 [shape = 'u32[]', space=smem, size = 0x4, offset = 0x4, fixed_abs, tag = 'smem constant byte address 0x4 - core index']
  #allocation1 [shape = 'u32[144,128]{1,0:T(1,128)}', space=vmem, size = 0x12000, scoped, tag = 'internal scratch']
  #allocation2 [shape = 'f32[1,1]{1,0:T(1,128)S(1)}', space=vmem, size = 0x200, scoped, tag = 'scoped memory for tpu_custom_call.1']
  %s0 = inlined_call_operand.vmem [shape: bf16[16,1024], index: 0, kind: input, shape index: {}]
  %s1 = inlined_call_operand.hbm [shape: bf16[1024,256], index: 1, kind: input, shape index: {}]
  %s2 = inlined_call_operand.vmem [shape: f32[1,256], index: 2, kind: input, shape index: {}]
  %s3 = inlined_call_operand.vmem [shape: bf16[256,1], index: 3, kind: input, shape index: {}]
  %s4 = inlined_call_operand.<no memory space> [shape: f32[1,1], index: 4, kind: input, shape index: {}]
  %s5 = inlined_call_operand.vmem [shape: f32[16,1], index: 5, kind: output, shape index: {}]
  %s6 = sld [smem:[#allocation0]]
  $region57: #{tpu_custom_call.1} parent=0
    _
  %s8 = ssub.s32 1, %s6
  %s9 = scalar_select 0, %s8, %s6
  %v10 = vstv %s4
  %11 = vst [vmem:[#allocation2] sm:$0x1] %v10
  $region1: #{tpu_custom_call.1} parent=0
    #allocation3 [shape = 'u8[524288]{0}', space=vmem, size = 0x80000, scoped, tag = 'input window, operand 1, single buffered']
    #allocation4 [shape = 's32[2]{0}', space=sflag, size = 0x8, scoped, tag = 'scoped memory for tpu_custom_call.1']
    %12 = vsyncpa [#allocation4], 0
    loop: start=0, step=1, limit=4
    $region2: #{tpu_custom_call.1} parent=1 // loop_pre_header
      _
    $region3: #{tpu_custom_call.1} parent=1 // loop_header
      %s14 = sphi 0, %s18
      %p15 = scmp.ge.s32.totalorder %s14, 4
      %s24 = sphi 0, %s26
      %s27 = sphi 0, %s24
      %s28 = sphi 0, %s27
      %s44 = sphi 0, %s28
      %s48 = sphi 0, %s48
      %s50 = sphi 0, %s48
      %s51 = sphi 0, %s50
      %s65 = sphi 0, %s51
      %s69 = sphi 0, %s69
      %s71 = sphi 0, %s69
      %s72 = sphi 0, %s71
      %s86 = sphi 0, %s72
      %s90 = sphi 0, %s90
      %s92 = sphi 0, %s90
      %s93 = sphi 0, %s92
      %s107 = sphi 0, %s93
      %s111 = sphi 0, %s111
      %s113 = sphi 0, %s111
      %s114 = sphi 0, %s113
      %s128 = sphi 0, %s114
      %s134 = sphi 0, %s136
      %s137 = sphi 0, %s134
      %s138 = sphi 0, %s137
      %s154 = sphi 0, %s138
    $region4: #{tpu_custom_call.1} parent=1 // loop_header_branch
      %17 = sbr.rel (%p15) target = $region8
    $region5: #{tpu_custom_call.1} parent=1 // loop_body
      %s19 = ssub.s32 %s14, 1
      %s20 = ssub.s32 %s14, 2
      %s21 = sadd.s32 %s14, 1
      %s22 = ssub.s32 %s14, %s21
      %p23 = scmp.eq.s32.totalorder %s22, 0
      %s25 = sadd.s32 %s24, 1
      %s26 = scalar_select %p23, %s24, %s25
      %p29 = pneg %p23
      %p30 = scmp.eq.s32.totalorder %s14, 1
      %p31 = por %p29, %p30
      %p32 = scmp.ne.s32.totalorder %s24, %s27
      %p33 = scmp.eq.s32.totalorder %s14, 0
      %p34 = por %p32, %p33
      %p35 = scmp.ne.s32.totalorder %s24, %s27
      %p36 = scmp.eq.s32.totalorder %s19, 1
      %p37 = por %p35, %p36
      %p38 = scmp.ne.s32.totalorder %s27, %s28
      %p39 = scmp.eq.s32.totalorder %s19, 0
      %p40 = por %p38, %p39
      %p41 = scmp.ne.s32.totalorder %s27, %s28
      %p42 = scmp.eq.s32.totalorder %s20, 1
      %p43 = por %p41, %p42
      %p45 = scmp.ne.s32.totalorder %s28, %s44
      %p46 = scmp.eq.s32.totalorder %s20, 0
      %p47 = por %p45, %p46
      %s49 = sadd.s32 %s48, 1
      %p52 = scmp.eq.s32.totalorder %s14, 1
      %p53 = scmp.ne.s32.totalorder %s48, %s50
      %p54 = scmp.eq.s32.totalorder %s14, 0
      %p55 = por %p53, %p54
      %p56 = scmp.ne.s32.totalorder %s48, %s50
      %p57 = scmp.eq.s32.totalorder %s19, 1
      %p58 = por %p56, %p57
      %p59 = scmp.ne.s32.totalorder %s50, %s51
      %p60 = scmp.eq.s32.totalorder %s19, 0
      %p61 = por %p59, %p60
      %p62 = scmp.ne.s32.totalorder %s50, %s51
      %p63 = scmp.eq.s32.totalorder %s20, 1
      %p64 = por %p62, %p63
      %p66 = scmp.ne.s32.totalorder %s51, %s65
      %p67 = scmp.eq.s32.totalorder %s20, 0
      %p68 = por %p66, %p67
      %s70 = sadd.s32 %s69, 1
      %p73 = scmp.eq.s32.totalorder %s14, 1
      %p74 = scmp.ne.s32.totalorder %s69, %s71
      %p75 = scmp.eq.s32.totalorder %s14, 0
      %p76 = por %p74, %p75
      %p77 = scmp.ne.s32.totalorder %s69, %s71
      %p78 = scmp.eq.s32.totalorder %s19, 1
      %p79 = por %p77, %p78
      %p80 = scmp.ne.s32.totalorder %s71, %s72
      %p81 = scmp.eq.s32.totalorder %s19, 0
      %p82 = por %p80, %p81
      %p83 = scmp.ne.s32.totalorder %s71, %s72
      %p84 = scmp.eq.s32.totalorder %s20, 1
      %p85 = por %p83, %p84
      %p87 = scmp.ne.s32.totalorder %s72, %s86
      %p88 = scmp.eq.s32.totalorder %s20, 0
      %p89 = por %p87, %p88
      %s91 = sadd.s32 %s90, 1
      %p94 = scmp.eq.s32.totalorder %s14, 1
      %p95 = scmp.ne.s32.totalorder %s90, %s92
      %p96 = scmp.eq.s32.totalorder %s14, 0
      %p97 = por %p95, %p96
      %p98 = scmp.ne.s32.totalorder %s90, %s92
      %p99 = scmp.eq.s32.totalorder %s19, 1
      %p100 = por %p98, %p99
      %p101 = scmp.ne.s32.totalorder %s92, %s93
      %p102 = scmp.eq.s32.totalorder %s19, 0
      %p103 = por %p101, %p102
      %p104 = scmp.ne.s32.totalorder %s92, %s93
      %p105 = scmp.eq.s32.totalorder %s20, 1
      %p106 = por %p104, %p105
      %p108 = scmp.ne.s32.totalorder %s93, %s107
      %p109 = scmp.eq.s32.totalorder %s20, 0
      %p110 = por %p108, %p109
      %s112 = sadd.s32 %s111, 1
      %p115 = scmp.eq.s32.totalorder %s14, 1
      %p116 = scmp.ne.s32.totalorder %s111, %s113
      %p117 = scmp.eq.s32.totalorder %s14, 0
      %p118 = por %p116, %p117
      %p119 = scmp.ne.s32.totalorder %s111, %s113
      %p120 = scmp.eq.s32.totalorder %s19, 1
      %p121 = por %p119, %p120
      %p122 = scmp.ne.s32.totalorder %s113, %s114
      %p123 = scmp.eq.s32.totalorder %s19, 0
      %p124 = por %p122, %p123
      %p125 = scmp.ne.s32.totalorder %s113, %s114
      %p126 = scmp.eq.s32.totalorder %s20, 1
      %p127 = por %p125, %p126
      %p129 = scmp.ne.s32.totalorder %s114, %s128
      %p130 = scmp.eq.s32.totalorder %s20, 0
      %p131 = por %p129, %p130
      %s132 = ssub.s32 %s14, %s21
      %p133 = scmp.eq.s32.totalorder %s132, 0
      %s135 = sadd.s32 %s134, 1
      %s136 = scalar_select %p133, %s134, %s135
      %p139 = pneg %p133
      %p140 = scmp.eq.s32.totalorder %s14, 1
      %p141 = por %p139, %p140
      %p142 = scmp.ne.s32.totalorder %s134, %s137
      %p143 = scmp.eq.s32.totalorder %s14, 0
      %p144 = por %p142, %p143
      %p145 = scmp.ne.s32.totalorder %s134, %s137
      %p146 = scmp.eq.s32.totalorder %s19, 1
      %p147 = por %p145, %p146
      %p148 = scmp.ne.s32.totalorder %s137, %s138
      %p149 = scmp.eq.s32.totalorder %s19, 0
      %p150 = por %p148, %p149
      %p151 = scmp.ne.s32.totalorder %s137, %s138
      %p152 = scmp.eq.s32.totalorder %s20, 1
      %p153 = por %p151, %p152
      %p155 = scmp.ne.s32.totalorder %s138, %s154
      %p156 = scmp.eq.s32.totalorder %s20, 0
      %p157 = por %p155, %p156
      %p158 = scmp.le.s32.totalorder 1, %s14
      %p159 = scmp.lt.s32.totalorder %s14, 3
      %p160 = pnand %p158, %p159
      %p161 = pneg %p160
      // Predicated region
      $region9: #{tpu_custom_call.1} parent=5 // pred_check
        _
      $region10: #{tpu_custom_call.1} parent=5 // pred_check_branch
        %163 = sbr.rel (%p160) target = $region12
      $region11: #{tpu_custom_call.1} parent=5 // pred_region
        %s164 = ssub.s32 %s14, 1
        // Predicated region
        $region13: #{tpu_custom_call.1} parent=11 // pred_check
          %p165 = pneg %p61
        $region14: #{tpu_custom_call.1} parent=11 // pred_check_branch
          %167 = sbr.rel (%p165) target = $region16
        $region15: #{tpu_custom_call.1} parent=11 // pred_region
          %s169 = ssub.s32 16384, 16384
          %170 = vsyncadd [#allocation4], %s169
          %s171 = sshll.u32 [#allocation3], 4
          %s172 = int_to_ptr.vmem [resolvable:$true] %s171
          %177 = dma.hbm_to_vmem [thread:$0]  %s1, 16384, %s172, [#allocation4], 128, 128, 8
        $region16: #{tpu_custom_call.1} parent=11 // pred_fallthru
          _
        // Predicated region
        $region17: #{tpu_custom_call.1} parent=11 // pred_check
          %p178 = pneg %p82
        $region18: #{tpu_custom_call.1} parent=11 // pred_check_branch
          %180 = sbr.rel (%p178) target = $region20
        $region19: #{tpu_custom_call.1} parent=11 // pred_region
          _
        $region20: #{tpu_custom_call.1} parent=11 // pred_fallthru
          _
        // Predicated region
        $region21: #{tpu_custom_call.1} parent=11 // pred_check
          %p181 = pneg %p103
        $region22: #{tpu_custom_call.1} parent=11 // pred_check_branch
          %183 = sbr.rel (%p181) target = $region24
        $region23: #{tpu_custom_call.1} parent=11 // pred_region
          _
        $region24: #{tpu_custom_call.1} parent=11 // pred_fallthru
          _
        // Predicated region
        $region25: #{tpu_custom_call.1} parent=11 // pred_check
          %p184 = pneg %p124
        $region26: #{tpu_custom_call.1} parent=11 // pred_check_branch
          %186 = sbr.rel (%p184) target = $region28
        $region27: #{tpu_custom_call.1} parent=11 // pred_region
          _
        $region28: #{tpu_custom_call.1} parent=11 // pred_fallthru
          _
      $region12: #{tpu_custom_call.1} parent=5 // pred_fallthru
        _
      %p187 = scmp.lt.s32.totalorder %s14, 2
      // Predicated region
      $region29: #{tpu_custom_call.1} parent=5 // pred_check
        %p188 = pneg %p187
      $region30: #{tpu_custom_call.1} parent=5 // pred_check_branch
        %190 = sbr.rel (%p188) target = $region32
      $region31: #{tpu_custom_call.1} parent=5 // pred_region
        // Predicated region
        $region33: #{tpu_custom_call.1} parent=31 // pred_check
          %p191 = pneg %p34
        $region34: #{tpu_custom_call.1} parent=31 // pred_check_branch
          %193 = sbr.rel (%p191) target = $region36
        $region35: #{tpu_custom_call.1} parent=31 // pred_region
          %p194 = scmp.lt.s32.totalorder %s14, 1
          %s195 = scalar_select %p194, %s14, 1
          %s196 = smul.addr %s195, 8
          %s197 = smul.addr %s196, 4
          %s198 = scalar_lea.vmem %s0, %s197
        $region36: #{tpu_custom_call.1} parent=31 // pred_fallthru
          _
      $region32: #{tpu_custom_call.1} parent=5 // pred_fallthru
        _
      %p199 = scmp.le.s32.totalorder 1, %s14
      %p200 = scmp.lt.s32.totalorder %s14, 3
      %p201 = pnand %p199, %p200
      %p202 = pneg %p201
      // Predicated region
      $region37: #{tpu_custom_call.1} parent=5 // pred_check
        _
      $region38: #{tpu_custom_call.1} parent=5 // pred_check_branch
        %204 = sbr.rel (%p201) target = $region40
      $region39: #{tpu_custom_call.1} parent=5 // pred_region
        %s205 = ssub.s32 %s14, 1
        // Predicated region
        $region41: #{tpu_custom_call.1} parent=39 // pred_check
          %p206 = pneg %p61
        $region42: #{tpu_custom_call.1} parent=39 // pred_check_branch
          %208 = sbr.rel (%p206) target = $region44
        $region43: #{tpu_custom_call.1} parent=39 // pred_region
          %209 = dma.done [#allocation4], 16384
        $region44: #{tpu_custom_call.1} parent=39 // pred_fallthru
          _
        %p210 = scmp.lt.s32.totalorder %s19, 1
        %s211 = scalar_select %p210, %s19, 1
        %s212 = smul.addr %s211, 8
        %s213 = smul.addr %s212, 4
        %s214 = scalar_lea.vmem %s0, %s213
        %p215 = pneg %p40
        %p216 = pneg %p37
        %p217 = pneg %p61
        %p218 = pneg %p58
        %p219 = pneg %p82
        %p220 = pneg %p79
        %p221 = pneg %p103
        %p222 = pneg %p100
        %p223 = pneg %p124
        %p224 = pneg %p121
        %p225 = pneg %p150
        %p226 = pneg %p147
        %p227 = scmp.lt.s32.totalorder %s19, 1
        %s228 = scalar_select %p227, %s19, 1
        %s229 = smul.addr %s228, 8
        %s230 = scalar_lea.vmem %s5, %s229
        %p231 = scmp.lt.s32.totalorder %s19, 1
        %s232 = scalar_select %p231, %s19, 1
        %s233 = smul.addr %s232, 8
        %s234 = smul.addr %s233, 4
        %s235 = scalar_lea.vmem %s0, %s234
        %p236 = scmp.lt.s32.totalorder %s19, 1
        %s237 = scalar_select %p236, %s19, 1
        %s238 = smul.addr %s237, 8
        %s239 = scalar_lea.vmem %s5, %s238
        %v241 = vld [vmem:[%s235] sm:$0xff]
        %v242 = vld [vmem:[%s235 + $0x8] sm:$0xff]
        %v243 = vld [vmem:[%s235 + $0x10] sm:$0xff]
        %v244 = vld [vmem:[%s235 + $0x18] sm:$0xff]
        %v245 = vld [vmem:[#allocation3] sm:$0xff]
        %v246 = vld [vmem:[#allocation3 + $0x8] sm:$0xff]
        %v247 = vld [vmem:[#allocation3 + $0x10] sm:$0xff]
        %v248 = vld [vmem:[#allocation3 + $0x18] sm:$0xff]
        %v249 = vld [vmem:[#allocation3 + $0x20] sm:$0xff]
        %v250 = vld [vmem:[#allocation3 + $0x28] sm:$0xff]
        %v251 = vld [vmem:[#allocation3 + $0x30] sm:$0xff]
        %v252 = vld [vmem:[#allocation3 + $0x38] sm:$0xff]
        %v253 = vld [vmem:[#allocation3 + $0x40] sm:$0xff]
        %v254 = vld [vmem:[#allocation3 + $0x48] sm:$0xff]
        %v255 = vld [vmem:[#allocation3 + $0x50] sm:$0xff]
        %v256 = vld [vmem:[#allocation3 + $0x58] sm:$0xff]
        %v257 = vld [vmem:[#allocation3 + $0x60] sm:$0xff]
        %v258 = vld [vmem:[#allocation3 + $0x68] sm:$0xff]
        %v259 = vld [vmem:[#allocation3 + $0x70] sm:$0xff]
        %v260 = vld [vmem:[#allocation3 + $0x78] sm:$0xff]
        %v261 = vld [vmem:[#allocation3 + $0x80] sm:$0xff]
        %v262 = vld [vmem:[#allocation3 + $0x88] sm:$0xff]
        %v263 = vld [vmem:[#allocation3 + $0x90] sm:$0xff]
        %v264 = vld [vmem:[#allocation3 + $0x98] sm:$0xff]
        %v265 = vld [vmem:[#allocation3 + $0xa0] sm:$0xff]
        %v266 = vld [vmem:[#allocation3 + $0xa8] sm:$0xff]
        %v267 = vld [vmem:[#allocation3 + $0xb0] sm:$0xff]
        %v268 = vld [vmem:[#allocation3 + $0xb8] sm:$0xff]
        %v269 = vld [vmem:[#allocation3 + $0xc0] sm:$0xff]
        %v270 = vld [vmem:[#allocation3 + $0xc8] sm:$0xff]
        %v271 = vld [vmem:[#allocation3 + $0xd0] sm:$0xff]
        %v272 = vld [vmem:[#allocation3 + $0xd8] sm:$0xff]
        %v273 = vld [vmem:[#allocation3 + $0xe0] sm:$0xff]
        %v274 = vld [vmem:[#allocation3 + $0xe8] sm:$0xff]
        %v275 = vld [vmem:[#allocation3 + $0xf0] sm:$0xff]
        %v276 = vld [vmem:[#allocation3 + $0xf8] sm:$0xff]
        %v277 = vld [vmem:[#allocation3 + $0x100] sm:$0xff]
        %v278 = vld [vmem:[#allocation3 + $0x108] sm:$0xff]
        %v279 = vld [vmem:[#allocation3 + $0x110] sm:$0xff]
        %v280 = vld [vmem:[#allocation3 + $0x118] sm:$0xff]
        %v281 = vld [vmem:[#allocation3 + $0x120] sm:$0xff]
        %v282 = vld [vmem:[#allocation3 + $0x128] sm:$0xff]
        %v283 = vld [vmem:[#allocation3 + $0x130] sm:$0xff]
        %v284 = vld [vmem:[#allocation3 + $0x138] sm:$0xff]
        %v285 = vld [vmem:[#allocation3 + $0x140] sm:$0xff]
        %v286 = vld [vmem:[#allocation3 + $0x148] sm:$0xff]
        %v287 = vld [vmem:[#allocation3 + $0x150] sm:$0xff]
        %v288 = vld [vmem:[#allocation3 + $0x158] sm:$0xff]
        %v289 = vld [vmem:[#allocation3 + $0x160] sm:$0xff]
        %v290 = vld [vmem:[#allocation3 + $0x168] sm:$0xff]
        %v291 = vld [vmem:[#allocation3 + $0x170] sm:$0xff]
        %v292 = vld [vmem:[#allocation3 + $0x178] sm:$0xff]
        %v293 = vld [vmem:[#allocation3 + $0x180] sm:$0xff]
        %v294 = vld [vmem:[#allocation3 + $0x188] sm:$0xff]
        %v295 = vld [vmem:[#allocation3 + $0x190] sm:$0xff]
        %v296 = vld [vmem:[#allocation3 + $0x198] sm:$0xff]
        %v297 = vld [vmem:[#allocation3 + $0x1a0] sm:$0xff]
        %v298 = vld [vmem:[#allocation3 + $0x1a8] sm:$0xff]
        %v299 = vld [vmem:[#allocation3 + $0x1b0] sm:$0xff]
        %v300 = vld [vmem:[#allocation3 + $0x1b8] sm:$0xff]
        %v301 = vld [vmem:[#allocation3 + $0x1c0] sm:$0xff]
        %v302 = vld [vmem:[#allocation3 + $0x1c8] sm:$0xff]
        %v303 = vld [vmem:[#allocation3 + $0x1d0] sm:$0xff]
        %v304 = vld [vmem:[#allocation3 + $0x1d8] sm:$0xff]
        %v305 = vld [vmem:[#allocation3 + $0x1e0] sm:$0xff]
        %v306 = vld [vmem:[#allocation3 + $0x1e8] sm:$0xff]
        %v307 = vld [vmem:[#allocation3 + $0x1f0] sm:$0xff]
        %v308 = vld [vmem:[#allocation3 + $0x1f8] sm:$0xff]
        %v309 = vld [vmem:[#allocation3 + $0x200] sm:$0xff]
        %v310 = vld [vmem:[#allocation3 + $0x208] sm:$0xff]
        %v311 = vld [vmem:[#allocation3 + $0x210] sm:$0xff]
        %v312 = vld [vmem:[#allocation3 + $0x218] sm:$0xff]
        %v313 = vld [vmem:[#allocation3 + $0x220] sm:$0xff]
        %v314 = vld [vmem:[#allocation3 + $0x228] sm:$0xff]
        %v315 = vld [vmem:[#allocation3 + $0x230] sm:$0xff]
        %v316 = vld [vmem:[#allocation3 + $0x238] sm:$0xff]
        %v317 = vld [vmem:[#allocation3 + $0x240] sm:$0xff]
        %v318 = vld [vmem:[#allocation3 + $0x248] sm:$0xff]
        %v319 = vld [vmem:[#allocation3 + $0x250] sm:$0xff]
        %v320 = vld [vmem:[#allocation3 + $0x258] sm:$0xff]
        %v321 = vld [vmem:[#allocation3 + $0x260] sm:$0xff]
        %v322 = vld [vmem:[#allocation3 + $0x268] sm:$0xff]
        %v323 = vld [vmem:[#allocation3 + $0x270] sm:$0xff]
        %v324 = vld [vmem:[#allocation3 + $0x278] sm:$0xff]
        %v325 = vld [vmem:[#allocation3 + $0x280] sm:$0xff]
        %v326 = vld [vmem:[#allocation3 + $0x288] sm:$0xff]
        %v327 = vld [vmem:[#allocation3 + $0x290] sm:$0xff]
        %v328 = vld [vmem:[#allocation3 + $0x298] sm:$0xff]
        %v329 = vld [vmem:[#allocation3 + $0x2a0] sm:$0xff]
        %v330 = vld [vmem:[#allocation3 + $0x2a8] sm:$0xff]
        %v331 = vld [vmem:[#allocation3 + $0x2b0] sm:$0xff]
        %v332 = vld [vmem:[#allocation3 + $0x2b8] sm:$0xff]
        %v333 = vld [vmem:[#allocation3 + $0x2c0] sm:$0xff]
        %v334 = vld [vmem:[#allocation3 + $0x2c8] sm:$0xff]
        %v335 = vld [vmem:[#allocation3 + $0x2d0] sm:$0xff]
        %v336 = vld [vmem:[#allocation3 + $0x2d8] sm:$0xff]
        %v337 = vld [vmem:[#allocation3 + $0x2e0] sm:$0xff]
        %v338 = vld [vmem:[#allocation3 + $0x2e8] sm:$0xff]
        %v339 = vld [vmem:[#allocation3 + $0x2f0] sm:$0xff]
        %v340 = vld [vmem:[#allocation3 + $0x2f8] sm:$0xff]
        %v341 = vld [vmem:[#allocation3 + $0x300] sm:$0xff]
        %v342 = vld [vmem:[#allocation3 + $0x308] sm:$0xff]
        %v343 = vld [vmem:[#allocation3 + $0x310] sm:$0xff]
        %v344 = vld [vmem:[#allocation3 + $0x318] sm:$0xff]
        %v345 = vld [vmem:[#allocation3 + $0x320] sm:$0xff]
        %v346 = vld [vmem:[#allocation3 + $0x328] sm:$0xff]
        %v347 = vld [vmem:[#allocation3 + $0x330] sm:$0xff]
        %v348 = vld [vmem:[#allocation3 + $0x338] sm:$0xff]
        %v349 = vld [vmem:[#allocation3 + $0x340] sm:$0xff]
        %v350 = vld [vmem:[#allocation3 + $0x348] sm:$0xff]
        %v351 = vld [vmem:[#allocation3 + $0x350] sm:$0xff]
        %v352 = vld [vmem:[#allocation3 + $0x358] sm:$0xff]
        %v353 = vld [vmem:[#allocation3 + $0x360] sm:$0xff]
        %v354 = vld [vmem:[#allocation3 + $0x368] sm:$0xff]
        %v355 = vld [vmem:[#allocation3 + $0x370] sm:$0xff]
        %v356 = vld [vmem:[#allocation3 + $0x378] sm:$0xff]
        %v357 = vld [vmem:[#allocation3 + $0x380] sm:$0xff]
        %v358 = vld [vmem:[#allocation3 + $0x388] sm:$0xff]
        %v359 = vld [vmem:[#allocation3 + $0x390] sm:$0xff]
        %v360 = vld [vmem:[#allocation3 + $0x398] sm:$0xff]
        %v361 = vld [vmem:[#allocation3 + $0x3a0] sm:$0xff]
        %v362 = vld [vmem:[#allocation3 + $0x3a8] sm:$0xff]
        %v363 = vld [vmem:[#allocation3 + $0x3b0] sm:$0xff]
        %v364 = vld [vmem:[#allocation3 + $0x3b8] sm:$0xff]
        %v365 = vld [vmem:[#allocation3 + $0x3c0] sm:$0xff]
        %v366 = vld [vmem:[#allocation3 + $0x3c8] sm:$0xff]
        %v367 = vld [vmem:[#allocation3 + $0x3d0] sm:$0xff]
        %v368 = vld [vmem:[#allocation3 + $0x3d8] sm:$0xff]
        %v369 = vld [vmem:[#allocation3 + $0x3e0] sm:$0xff]
        %v370 = vld [vmem:[#allocation3 + $0x3e8] sm:$0xff]
        %v371 = vld [vmem:[#allocation3 + $0x3f0] sm:$0xff]
        %v372 = vld [vmem:[#allocation3 + $0x3f8] sm:$0xff]
        %v373 = vld [vmem:[%s2] sm:$0x3]
        %v375 = vlaneseq
        %v376 = vshrl.u32 %v375, 7
        %v377 = vsub.s32 0, %v376
        %v378 = vrot.slane %v373, %v377
        %v379 = vlaneseq
        %v380 = vshrl.u32 %v379, 7
        %v381 = vsub.s32 1, %v380
        %v382 = vrot.slane %v373, %v381
        %v389 = vunpack.c.l.b16 %v241
        %v390 = vunpack.c.h.b16 %v241
        %v391 = vunpack.c.l.b16 %v242
        %v392 = vunpack.c.h.b16 %v242
        %v393 = vunpack.c.l.b16 %v243
        %v394 = vunpack.c.h.b16 %v243
        %v395 = vunpack.c.l.b16 %v244
        %v396 = vunpack.c.h.b16 %v244
        %v397 = vpack.c.b16 %v389, %v389
        %v398 = vpack.c.b16 %v390, %v390
        %v399 = vpack.c.b16 %v391, %v391
        %v400 = vpack.c.b16 %v392, %v392
        %v401 = vpack.c.b16 %v393, %v393
        %v402 = vpack.c.b16 %v394, %v394
        %v403 = vpack.c.b16 %v395, %v395
        %v404 = vpack.c.b16 %v396, %v396
        %v541 = vunpack.c.l.b16 %v245
        %v542 = vunpack.c.h.b16 %v245
        %v543 = vunpack.c.l.b16 %v246
        %v544 = vunpack.c.h.b16 %v246
        %v545 = vunpack.c.l.b16 %v247
        %v546 = vunpack.c.h.b16 %v247
        %v547 = vunpack.c.l.b16 %v248
        %v548 = vunpack.c.h.b16 %v248
        %v549 = vunpack.c.l.b16 %v249
        %v550 = vunpack.c.h.b16 %v249
        %v551 = vunpack.c.l.b16 %v250
        %v552 = vunpack.c.h.b16 %v250
        %v553 = vunpack.c.l.b16 %v251
        %v554 = vunpack.c.h.b16 %v251
        %v555 = vunpack.c.l.b16 %v252
        %v556 = vunpack.c.h.b16 %v252
        %v557 = vunpack.c.l.b16 %v253
        %v558 = vunpack.c.h.b16 %v253
        %v559 = vunpack.c.l.b16 %v254
        %v560 = vunpack.c.h.b16 %v254
        %v561 = vunpack.c.l.b16 %v255
        %v562 = vunpack.c.h.b16 %v255
        %v563 = vunpack.c.l.b16 %v256
        %v564 = vunpack.c.h.b16 %v256
        %v565 = vunpack.c.l.b16 %v257
        %v566 = vunpack.c.h.b16 %v257
        %v567 = vunpack.c.l.b16 %v258
        %v568 = vunpack.c.h.b16 %v258
        %v569 = vunpack.c.l.b16 %v259
        %v570 = vunpack.c.h.b16 %v259
        %v571 = vunpack.c.l.b16 %v260
        %v572 = vunpack.c.h.b16 %v260
        %v573 = vunpack.c.l.b16 %v261
        %v574 = vunpack.c.h.b16 %v261
        %v575 = vunpack.c.l.b16 %v262
        %v576 = vunpack.c.h.b16 %v262
        %v577 = vunpack.c.l.b16 %v263
        %v578 = vunpack.c.h.b16 %v263
        %v579 = vunpack.c.l.b16 %v264
        %v580 = vunpack.c.h.b16 %v264
        %v581 = vunpack.c.l.b16 %v265
        %v582 = vunpack.c.h.b16 %v265
        %v583 = vunpack.c.l.b16 %v266
        %v584 = vunpack.c.h.b16 %v266
        %v585 = vunpack.c.l.b16 %v267
        %v586 = vunpack.c.h.b16 %v267
        %v587 = vunpack.c.l.b16 %v268
        %v588 = vunpack.c.h.b16 %v268
        %v589 = vunpack.c.l.b16 %v269
        %v590 = vunpack.c.h.b16 %v269
        %v591 = vunpack.c.l.b16 %v270
        %v592 = vunpack.c.h.b16 %v270
        %v593 = vunpack.c.l.b16 %v271
        %v594 = vunpack.c.h.b16 %v271
        %v595 = vunpack.c.l.b16 %v272
        %v596 = vunpack.c.h.b16 %v272
        %v597 = vunpack.c.l.b16 %v273
        %v598 = vunpack.c.h.b16 %v273
        %v599 = vunpack.c.l.b16 %v274
        %v600 = vunpack.c.h.b16 %v274
        %v601 = vunpack.c.l.b16 %v275
        %v602 = vunpack.c.h.b16 %v275
        %v603 = vunpack.c.l.b16 %v276
        %v604 = vunpack.c.h.b16 %v276
        %v605 = vunpack.c.l.b16 %v277
        %v606 = vunpack.c.h.b16 %v277
        %v607 = vunpack.c.l.b16 %v278
        %v608 = vunpack.c.h.b16 %v278
        %v609 = vunpack.c.l.b16 %v279
        %v610 = vunpack.c.h.b16 %v279
        %v611 = vunpack.c.l.b16 %v280
        %v612 = vunpack.c.h.b16 %v280
        %v613 = vunpack.c.l.b16 %v281
        %v614 = vunpack.c.h.b16 %v281
        %v615 = vunpack.c.l.b16 %v282
        %v616 = vunpack.c.h.b16 %v282
        %v617 = vunpack.c.l.b16 %v283
        %v618 = vunpack.c.h.b16 %v283
        %v619 = vunpack.c.l.b16 %v284
        %v620 = vunpack.c.h.b16 %v284
        %v621 = vunpack.c.l.b16 %v285
        %v622 = vunpack.c.h.b16 %v285
        %v623 = vunpack.c.l.b16 %v286
        %v624 = vunpack.c.h.b16 %v286
        %v625 = vunpack.c.l.b16 %v287
        %v626 = vunpack.c.h.b16 %v287
        %v627 = vunpack.c.l.b16 %v288
        %v628 = vunpack.c.h.b16 %v288
        %v629 = vunpack.c.l.b16 %v289
        %v630 = vunpack.c.h.b16 %v289
        %v631 = vunpack.c.l.b16 %v290
        %v632 = vunpack.c.h.b16 %v290
        %v633 = vunpack.c.l.b16 %v291
        %v634 = vunpack.c.h.b16 %v291
        %v635 = vunpack.c.l.b16 %v292
        %v636 = vunpack.c.h.b16 %v292
        %v637 = vunpack.c.l.b16 %v293
        %v638 = vunpack.c.h.b16 %v293
        %v639 = vunpack.c.l.b16 %v294
        %v640 = vunpack.c.h.b16 %v294
        %v641 = vunpack.c.l.b16 %v295
        %v642 = vunpack.c.h.b16 %v295
        %v643 = vunpack.c.l.b16 %v296
        %v644 = vunpack.c.h.b16 %v296
        %v645 = vunpack.c.l.b16 %v297
        %v646 = vunpack.c.h.b16 %v297
        %v647 = vunpack.c.l.b16 %v298
        %v648 = vunpack.c.h.b16 %v298
        %v649 = vunpack.c.l.b16 %v299
        %v650 = vunpack.c.h.b16 %v299
        %v651 = vunpack.c.l.b16 %v300
        %v652 = vunpack.c.h.b16 %v300
        %v653 = vunpack.c.l.b16 %v301
        %v654 = vunpack.c.h.b16 %v301
        %v655 = vunpack.c.l.b16 %v302
        %v656 = vunpack.c.h.b16 %v302
        %v657 = vunpack.c.l.b16 %v303
        %v658 = vunpack.c.h.b16 %v303
        %v659 = vunpack.c.l.b16 %v304
        %v660 = vunpack.c.h.b16 %v304
        %v661 = vunpack.c.l.b16 %v305
        %v662 = vunpack.c.h.b16 %v305
        %v663 = vunpack.c.l.b16 %v306
        %v664 = vunpack.c.h.b16 %v306
        %v665 = vunpack.c.l.b16 %v307
        %v666 = vunpack.c.h.b16 %v307
        %v667 = vunpack.c.l.b16 %v308
        %v668 = vunpack.c.h.b16 %v308
        %v669 = vunpack.c.l.b16 %v309
        %v670 = vunpack.c.h.b16 %v309
        %v671 = vunpack.c.l.b16 %v310
        %v672 = vunpack.c.h.b16 %v310
        %v673 = vunpack.c.l.b16 %v311
        %v674 = vunpack.c.h.b16 %v311
        %v675 = vunpack.c.l.b16 %v312
        %v676 = vunpack.c.h.b16 %v312
        %v677 = vunpack.c.l.b16 %v313
        %v678 = vunpack.c.h.b16 %v313
        %v679 = vunpack.c.l.b16 %v314
        %v680 = vunpack.c.h.b16 %v314
        %v681 = vunpack.c.l.b16 %v315
        %v682 = vunpack.c.h.b16 %v315
        %v683 = vunpack.c.l.b16 %v316
        %v684 = vunpack.c.h.b16 %v316
        %v685 = vunpack.c.l.b16 %v317
        %v686 = vunpack.c.h.b16 %v317
        %v687 = vunpack.c.l.b16 %v318
        %v688 = vunpack.c.h.b16 %v318
        %v689 = vunpack.c.l.b16 %v319
        %v690 = vunpack.c.h.b16 %v319
        %v691 = vunpack.c.l.b16 %v320
        %v692 = vunpack.c.h.b16 %v320
        %v693 = vunpack.c.l.b16 %v321
        %v694 = vunpack.c.h.b16 %v321
        %v695 = vunpack.c.l.b16 %v322
        %v696 = vunpack.c.h.b16 %v322
        %v697 = vunpack.c.l.b16 %v323
        %v698 = vunpack.c.h.b16 %v323
        %v699 = vunpack.c.l.b16 %v324
        %v700 = vunpack.c.h.b16 %v324
        %v701 = vunpack.c.l.b16 %v325
        %v702 = vunpack.c.h.b16 %v325
        %v703 = vunpack.c.l.b16 %v326
        %v704 = vunpack.c.h.b16 %v326
        %v705 = vunpack.c.l.b16 %v327
        %v706 = vunpack.c.h.b16 %v327
        %v707 = vunpack.c.l.b16 %v328
        %v708 = vunpack.c.h.b16 %v328
        %v709 = vunpack.c.l.b16 %v329
        %v710 = vunpack.c.h.b16 %v329
        %v711 = vunpack.c.l.b16 %v330
        %v712 = vunpack.c.h.b16 %v330
        %v713 = vunpack.c.l.b16 %v331
        %v714 = vunpack.c.h.b16 %v331
        %v715 = vunpack.c.l.b16 %v332
        %v716 = vunpack.c.h.b16 %v332
        %v717 = vunpack.c.l.b16 %v333
        %v718 = vunpack.c.h.b16 %v333
        %v719 = vunpack.c.l.b16 %v334
        %v720 = vunpack.c.h.b16 %v334
        %v721 = vunpack.c.l.b16 %v335
        %v722 = vunpack.c.h.b16 %v335
        %v723 = vunpack.c.l.b16 %v336
        %v724 = vunpack.c.h.b16 %v336
        %v725 = vunpack.c.l.b16 %v337
        %v726 = vunpack.c.h.b16 %v337
        %v727 = vunpack.c.l.b16 %v338
        %v728 = vunpack.c.h.b16 %v338
        %v729 = vunpack.c.l.b16 %v339
        %v730 = vunpack.c.h.b16 %v339
        %v731 = vunpack.c.l.b16 %v340
        %v732 = vunpack.c.h.b16 %v340
        %v733 = vunpack.c.l.b16 %v341
        %v734 = vunpack.c.h.b16 %v341
        %v735 = vunpack.c.l.b16 %v342
        %v736 = vunpack.c.h.b16 %v342
        %v737 = vunpack.c.l.b16 %v343
        %v738 = vunpack.c.h.b16 %v343
        %v739 = vunpack.c.l.b16 %v344
        %v740 = vunpack.c.h.b16 %v344
        %v741 = vunpack.c.l.b16 %v345
        %v742 = vunpack.c.h.b16 %v345
        %v743 = vunpack.c.l.b16 %v346
        %v744 = vunpack.c.h.b16 %v346
        %v745 = vunpack.c.l.b16 %v347
        %v746 = vunpack.c.h.b16 %v347
        %v747 = vunpack.c.l.b16 %v348
        %v748 = vunpack.c.h.b16 %v348
        %v749 = vunpack.c.l.b16 %v349
        %v750 = vunpack.c.h.b16 %v349
        %v751 = vunpack.c.l.b16 %v350
        %v752 = vunpack.c.h.b16 %v350
        %v753 = vunpack.c.l.b16 %v351
        %v754 = vunpack.c.h.b16 %v351
        %v755 = vunpack.c.l.b16 %v352
        %v756 = vunpack.c.h.b16 %v352
        %v757 = vunpack.c.l.b16 %v353
        %v758 = vunpack.c.h.b16 %v353
        %v759 = vunpack.c.l.b16 %v354
        %v760 = vunpack.c.h.b16 %v354
        %v761 = vunpack.c.l.b16 %v355
        %v762 = vunpack.c.h.b16 %v355
        %v763 = vunpack.c.l.b16 %v356
        %v764 = vunpack.c.h.b16 %v356
        %v765 = vunpack.c.l.b16 %v357
        %v766 = vunpack.c.h.b16 %v357
        %v767 = vunpack.c.l.b16 %v358
        %v768 = vunpack.c.h.b16 %v358
        %v769 = vunpack.c.l.b16 %v359
        %v770 = vunpack.c.h.b16 %v359
        %v771 = vunpack.c.l.b16 %v360
        %v772 = vunpack.c.h.b16 %v360
        %v773 = vunpack.c.l.b16 %v361
        %v774 = vunpack.c.h.b16 %v361
        %v775 = vunpack.c.l.b16 %v362
        %v776 = vunpack.c.h.b16 %v362
        %v777 = vunpack.c.l.b16 %v363
        %v778 = vunpack.c.h.b16 %v363
        %v779 = vunpack.c.l.b16 %v364
        %v780 = vunpack.c.h.b16 %v364
        %v781 = vunpack.c.l.b16 %v365
        %v782 = vunpack.c.h.b16 %v365
        %v783 = vunpack.c.l.b16 %v366
        %v784 = vunpack.c.h.b16 %v366
        %v785 = vunpack.c.l.b16 %v367
        %v786 = vunpack.c.h.b16 %v367
        %v787 = vunpack.c.l.b16 %v368
        %v788 = vunpack.c.h.b16 %v368
        %v789 = vunpack.c.l.b16 %v369
        %v790 = vunpack.c.h.b16 %v369
        %v791 = vunpack.c.l.b16 %v370
        %v792 = vunpack.c.h.b16 %v370
        %v793 = vunpack.c.l.b16 %v371
        %v794 = vunpack.c.h.b16 %v371
        %v795 = vunpack.c.l.b16 %v372
        %v796 = vunpack.c.h.b16 %v372
        %v797 = vpack.c.b16 %v543, %v541
        %v798 = vpack.c.b16 %v544, %v542
        %v799 = vpack.c.b16 %v547, %v545
        %v800 = vpack.c.b16 %v548, %v546
        %v801 = vpack.c.b16 %v551, %v549
        %v802 = vpack.c.b16 %v552, %v550
        %v803 = vpack.c.b16 %v555, %v553
        %v804 = vpack.c.b16 %v556, %v554
        %v805 = vpack.c.b16 %v559, %v557
        %v806 = vpack.c.b16 %v560, %v558
        %v807 = vpack.c.b16 %v563, %v561
        %v808 = vpack.c.b16 %v564, %v562
        %v809 = vpack.c.b16 %v567, %v565
        %v810 = vpack.c.b16 %v568, %v566
        %v811 = vpack.c.b16 %v571, %v569
        %v812 = vpack.c.b16 %v572, %v570
        %v813 = vpack.c.b16 %v575, %v573
        %v814 = vpack.c.b16 %v576, %v574
        %v815 = vpack.c.b16 %v579, %v577
        %v816 = vpack.c.b16 %v580, %v578
        %v817 = vpack.c.b16 %v583, %v581
        %v818 = vpack.c.b16 %v584, %v582
        %v819 = vpack.c.b16 %v587, %v585
        %v820 = vpack.c.b16 %v588, %v586
        %v821 = vpack.c.b16 %v591, %v589
        %v822 = vpack.c.b16 %v592, %v590
        %v823 = vpack.c.b16 %v595, %v593
        %v824 = vpack.c.b16 %v596, %v594
        %v825 = vpack.c.b16 %v599, %v597
        %v826 = vpack.c.b16 %v600, %v598
        %v827 = vpack.c.b16 %v603, %v601
        %v828 = vpack.c.b16 %v604, %v602
        %v829 = vpack.c.b16 %v607, %v605
        %v830 = vpack.c.b16 %v608, %v606
        %v831 = vpack.c.b16 %v611, %v609
        %v832 = vpack.c.b16 %v612, %v610
        %v833 = vpack.c.b16 %v615, %v613
        %v834 = vpack.c.b16 %v616, %v614
        %v835 = vpack.c.b16 %v619, %v617
        %v836 = vpack.c.b16 %v620, %v618
        %v837 = vpack.c.b16 %v623, %v621
        %v838 = vpack.c.b16 %v624, %v622
        %v839 = vpack.c.b16 %v627, %v625
        %v840 = vpack.c.b16 %v628, %v626
        %v841 = vpack.c.b16 %v631, %v629
        %v842 = vpack.c.b16 %v632, %v630
        %v843 = vpack.c.b16 %v635, %v633
        %v844 = vpack.c.b16 %v636, %v634
        %v845 = vpack.c.b16 %v639, %v637
        %v846 = vpack.c.b16 %v640, %v638
        %v847 = vpack.c.b16 %v643, %v641
        %v848 = vpack.c.b16 %v644, %v642
        %v849 = vpack.c.b16 %v647, %v645
        %v850 = vpack.c.b16 %v648, %v646
        %v851 = vpack.c.b16 %v651, %v649
        %v852 = vpack.c.b16 %v652, %v650
        %v853 = vpack.c.b16 %v655, %v653
        %v854 = vpack.c.b16 %v656, %v654
        %v855 = vpack.c.b16 %v659, %v657
        %v856 = vpack.c.b16 %v660, %v658
        %v857 = vpack.c.b16 %v663, %v661
        %v858 = vpack.c.b16 %v664, %v662
        %v859 = vpack.c.b16 %v667, %v665
        %v860 = vpack.c.b16 %v668, %v666
        %v861 = vpack.c.b16 %v671, %v669
        %v862 = vpack.c.b16 %v672, %v670
        %v863 = vpack.c.b16 %v675, %v673
        %v864 = vpack.c.b16 %v676, %v674
        %v865 = vpack.c.b16 %v679, %v677
        %v866 = vpack.c.b16 %v680, %v678
        %v867 = vpack.c.b16 %v683, %v681
        %v868 = vpack.c.b16 %v684, %v682
        %v869 = vpack.c.b16 %v687, %v685
        %v870 = vpack.c.b16 %v688, %v686
        %v871 = vpack.c.b16 %v691, %v689
        %v872 = vpack.c.b16 %v692, %v690
        %v873 = vpack.c.b16 %v695, %v693
        %v874 = vpack.c.b16 %v696, %v694
        %v875 = vpack.c.b16 %v699, %v697
        %v876 = vpack.c.b16 %v700, %v698
        %v877 = vpack.c.b16 %v703, %v701
        %v878 = vpack.c.b16 %v704, %v702
        %v879 = vpack.c.b16 %v707, %v705
        %v880 = vpack.c.b16 %v708, %v706
        %v881 = vpack.c.b16 %v711, %v709
        %v882 = vpack.c.b16 %v712, %v710
        %v883 = vpack.c.b16 %v715, %v713
        %v884 = vpack.c.b16 %v716, %v714
        %v885 = vpack.c.b16 %v719, %v717
        %v886 = vpack.c.b16 %v720, %v718
        %v887 = vpack.c.b16 %v723, %v721
        %v888 = vpack.c.b16 %v724, %v722
        %v889 = vpack.c.b16 %v727, %v725
        %v890 = vpack.c.b16 %v728, %v726
        %v891 = vpack.c.b16 %v731, %v729
        %v892 = vpack.c.b16 %v732, %v730
        %v893 = vpack.c.b16 %v735, %v733
        %v894 = vpack.c.b16 %v736, %v734
        %v895 = vpack.c.b16 %v739, %v737
        %v896 = vpack.c.b16 %v740, %v738
        %v897 = vpack.c.b16 %v743, %v741
        %v898 = vpack.c.b16 %v744, %v742
        %v899 = vpack.c.b16 %v747, %v745
        %v900 = vpack.c.b16 %v748, %v746
        %v901 = vpack.c.b16 %v751, %v749
        %v902 = vpack.c.b16 %v752, %v750
        %v903 = vpack.c.b16 %v755, %v753
        %v904 = vpack.c.b16 %v756, %v754
        %v905 = vpack.c.b16 %v759, %v757
        %v906 = vpack.c.b16 %v760, %v758
        %v907 = vpack.c.b16 %v763, %v761
        %v908 = vpack.c.b16 %v764, %v762
        %v909 = vpack.c.b16 %v767, %v765
        %v910 = vpack.c.b16 %v768, %v766
        %v911 = vpack.c.b16 %v771, %v769
        %v912 = vpack.c.b16 %v772, %v770
        %v913 = vpack.c.b16 %v775, %v773
        %v914 = vpack.c.b16 %v776, %v774
        %v915 = vpack.c.b16 %v779, %v777
        %v916 = vpack.c.b16 %v780, %v778
        %v917 = vpack.c.b16 %v783, %v781
        %v918 = vpack.c.b16 %v784, %v782
        %v919 = vpack.c.b16 %v787, %v785
        %v920 = vpack.c.b16 %v788, %v786
        %v921 = vpack.c.b16 %v791, %v789
        %v922 = vpack.c.b16 %v792, %v790
        %v923 = vpack.c.b16 %v795, %v793
        %v924 = vpack.c.b16 %v796, %v794
        %1053 = vmatprep.subr.bf16.mxu0 %v798
        %1054 = vmatpush1.bf16.msra.mxu0 %v797
        %1055 = vmatprep.subr.bf16.mxu0 %v800
        %1056 = vmatpush1.bf16.msra.mxu0 %v799
        %1057 = vmatprep.subr.bf16.mxu0 %v802
        %1058 = vmatpush1.bf16.msra.mxu0 %v801
        %1059 = vmatprep.subr.bf16.mxu0 %v804
        %1060 = vmatpush1.bf16.msra.mxu0 %v803
        %1061 = vmatprep.subr.bf16.mxu0 %v806
        %1062 = vmatpush1.bf16.msra.mxu0 %v805
        %1063 = vmatprep.subr.bf16.mxu0 %v808
        %1064 = vmatpush1.bf16.msra.mxu0 %v807
        %1065 = vmatprep.subr.bf16.mxu0 %v810
        %1066 = vmatpush1.bf16.msra.mxu0 %v809
        %1067 = vmatprep.subr.bf16.mxu0 %v812
        %1068 = vmatpush1.bf16.msra.mxu0 %v811
        %1069 = vmatprep.subr.bf16.mxu0 %v814
        %1070 = vmatpush1.bf16.msra.mxu0 %v813
        %1071 = vmatprep.subr.bf16.mxu0 %v816
        %1072 = vmatpush1.bf16.msra.mxu0 %v815
        %1073 = vmatprep.subr.bf16.mxu0 %v818
        %1074 = vmatpush1.bf16.msra.mxu0 %v817
        %1075 = vmatprep.subr.bf16.mxu0 %v820
        %1076 = vmatpush1.bf16.msra.mxu0 %v819
        %1077 = vmatprep.subr.bf16.mxu0 %v822
        %1078 = vmatpush1.bf16.msra.mxu0 %v821
        %1079 = vmatprep.subr.bf16.mxu0 %v824
        %1080 = vmatpush1.bf16.msra.mxu0 %v823
        %1081 = vmatprep.subr.bf16.mxu0 %v826
        %1082 = vmatpush1.bf16.msra.mxu0 %v825
        %1083 = vmatprep.subr.bf16.mxu0 %v828
        %1084 = vmatpush1.bf16.msra.mxu0 %v827
        %1085 = vmatprep.mubr.bf16.mxu0 %v398
        %1086 = vmatmul.mubr.bf16.gmra.mrb[0].mxu0 %v397
        %v1087 = vpop.f32.mrb[0].mxu0
        %v1088 = vadd.f32 %v378, %v1087
        %v1089 = vpop.f32.mrb[0].mxu0
        %v1090 = vadd.f32 %v382, %v1089
        %v1091 = vpop.f32.mrb[0].mxu0
        %v1092 = vpop.f32.mrb[0].mxu0
        %1093 = vdwg.mxu0
        %1094 = vmatprep.subr.bf16.mxu0 %v830
        %1095 = vmatpush1.bf16.msra.mxu0 %v829
        %1096 = vmatprep.subr.bf16.mxu0 %v832
        %1097 = vmatpush1.bf16.msra.mxu0 %v831
        %1098 = vmatprep.subr.bf16.mxu0 %v834
        %1099 = vmatpush1.bf16.msra.mxu0 %v833
        %1100 = vmatprep.subr.bf16.mxu0 %v836
        %1101 = vmatpush1.bf16.msra.mxu0 %v835
        %1102 = vmatprep.subr.bf16.mxu0 %v838
        %1103 = vmatpush1.bf16.msra.mxu0 %v837
        %1104 = vmatprep.subr.bf16.mxu0 %v840
        %1105 = vmatpush1.bf16.msra.mxu0 %v839
        %1106 = vmatprep.subr.bf16.mxu0 %v842
        %1107 = vmatpush1.bf16.msra.mxu0 %v841
        %1108 = vmatprep.subr.bf16.mxu0 %v844
        %1109 = vmatpush1.bf16.msra.mxu0 %v843
        %1110 = vmatprep.subr.bf16.mxu0 %v846
        %1111 = vmatpush1.bf16.msra.mxu0 %v845
        %1112 = vmatprep.subr.bf16.mxu0 %v848
        %1113 = vmatpush1.bf16.msra.mxu0 %v847
        %1114 = vmatprep.subr.bf16.mxu0 %v850
        %1115 = vmatpush1.bf16.msra.mxu0 %v849
        %1116 = vmatprep.subr.bf16.mxu0 %v852
        %1117 = vmatpush1.bf16.msra.mxu0 %v851
        %1118 = vmatprep.subr.bf16.mxu0 %v854
        %1119 = vmatpush1.bf16.msra.mxu0 %v853
        %1120 = vmatprep.subr.bf16.mxu0 %v856
        %1121 = vmatpush1.bf16.msra.mxu0 %v855
        %1122 = vmatprep.subr.bf16.mxu0 %v858
        %1123 = vmatpush1.bf16.msra.mxu0 %v857
        %1124 = vmatprep.subr.bf16.mxu0 %v860
        %1125 = vmatpush1.bf16.msra.mxu0 %v859
        %1126 = vmatprep.mubr.bf16.mxu0 %v400
        %1127 = vmatmul.mubr.bf16.gmra.mrb[0].mxu0 %v399
        %v1128 = vpop.f32.mrb[0].mxu0
        %v1129 = vadd.f32 %v1088, %v1128
        %v1130 = vpop.f32.mrb[0].mxu0
        %v1131 = vadd.f32 %v1090, %v1130
        %v1132 = vpop.f32.mrb[0].mxu0
        %v1133 = vpop.f32.mrb[0].mxu0
        %1134 = vdwg.mxu0
        %1135 = vmatprep.subr.bf16.mxu0 %v862
        %1136 = vmatpush1.bf16.msra.mxu0 %v861
        %1137 = vmatprep.subr.bf16.mxu0 %v864
        %1138 = vmatpush1.bf16.msra.mxu0 %v863
        %1139 = vmatprep.subr.bf16.mxu0 %v866
        %1140 = vmatpush1.bf16.msra.mxu0 %v865
        %1141 = vmatprep.subr.bf16.mxu0 %v868
        %1142 = vmatpush1.bf16.msra.mxu0 %v867
        %1143 = vmatprep.subr.bf16.mxu0 %v870
        %1144 = vmatpush1.bf16.msra.mxu0 %v869
        %1145 = vmatprep.subr.bf16.mxu0 %v872
        %1146 = vmatpush1.bf16.msra.mxu0 %v871
        %1147 = vmatprep.subr.bf16.mxu0 %v874
        %1148 = vmatpush1.bf16.msra.mxu0 %v873
        %1149 = vmatprep.subr.bf16.mxu0 %v876
        %1150 = vmatpush1.bf16.msra.mxu0 %v875
        %1151 = vmatprep.subr.bf16.mxu0 %v878
        %1152 = vmatpush1.bf16.msra.mxu0 %v877
        %1153 = vmatprep.subr.bf16.mxu0 %v880
        %1154 = vmatpush1.bf16.msra.mxu0 %v879
        %1155 = vmatprep.subr.bf16.mxu0 %v882
        %1156 = vmatpush1.bf16.msra.mxu0 %v881
        %1157 = vmatprep.subr.bf16.mxu0 %v884
        %1158 = vmatpush1.bf16.msra.mxu0 %v883
        %1159 = vmatprep.subr.bf16.mxu0 %v886
        %1160 = vmatpush1.bf16.msra.mxu0 %v885
        %1161 = vmatprep.subr.bf16.mxu0 %v888
        %1162 = vmatpush1.bf16.msra.mxu0 %v887
        %1163 = vmatprep.subr.bf16.mxu0 %v890
        %1164 = vmatpush1.bf16.msra.mxu0 %v889
        %1165 = vmatprep.subr.bf16.mxu0 %v892
        %1166 = vmatpush1.bf16.msra.mxu0 %v891
        %1167 = vmatprep.mubr.bf16.mxu0 %v402
        %1168 = vmatmul.mubr.bf16.gmra.mrb[0].mxu0 %v401
        %v1169 = vpop.f32.mrb[0].mxu0
        %v1170 = vadd.f32 %v1129, %v1169
        %v1171 = vpop.f32.mrb[0].mxu0
        %v1172 = vadd.f32 %v1131, %v1171
        %v1173 = vpop.f32.mrb[0].mxu0
        %v1174 = vpop.f32.mrb[0].mxu0
        %1175 = vdwg.mxu0
        %1176 = vmatprep.subr.bf16.mxu0 %v894
        %1177 = vmatpush1.bf16.msra.mxu0 %v893
        %1178 = vmatprep.subr.bf16.mxu0 %v896
        %1179 = vmatpush1.bf16.msra.mxu0 %v895
        %1180 = vmatprep.subr.bf16.mxu0 %v898
        %1181 = vmatpush1.bf16.msra.mxu0 %v897
        %1182 = vmatprep.subr.bf16.mxu0 %v900
        %1183 = vmatpush1.bf16.msra.mxu0 %v899
        %1184 = vmatprep.subr.bf16.mxu0 %v902
        %1185 = vmatpush1.bf16.msra.mxu0 %v901
        %1186 = vmatprep.subr.bf16.mxu0 %v904
        %1187 = vmatpush1.bf16.msra.mxu0 %v903
        %1188 = vmatprep.subr.bf16.mxu0 %v906
        %1189 = vmatpush1.bf16.msra.mxu0 %v905
        %1190 = vmatprep.subr.bf16.mxu0 %v908
        %1191 = vmatpush1.bf16.msra.mxu0 %v907
        %1192 = vmatprep.subr.bf16.mxu0 %v910
        %1193 = vmatpush1.bf16.msra.mxu0 %v909
        %1194 = vmatprep.subr.bf16.mxu0 %v912
        %1195 = vmatpush1.bf16.msra.mxu0 %v911
        %1196 = vmatprep.subr.bf16.mxu0 %v914
        %1197 = vmatpush1.bf16.msra.mxu0 %v913
        %1198 = vmatprep.subr.bf16.mxu0 %v916
        %1199 = vmatpush1.bf16.msra.mxu0 %v915
        %1200 = vmatprep.subr.bf16.mxu0 %v918
        %1201 = vmatpush1.bf16.msra.mxu0 %v917
        %1202 = vmatprep.subr.bf16.mxu0 %v920
        %1203 = vmatpush1.bf16.msra.mxu0 %v919
        %1204 = vmatprep.subr.bf16.mxu0 %v922
        %1205 = vmatpush1.bf16.msra.mxu0 %v921
        %1206 = vmatprep.subr.bf16.mxu0 %v924
        %1207 = vmatpush1.bf16.msra.mxu0 %v923
        %1208 = vmatprep.mubr.bf16.mxu0 %v404
        %1209 = vmatmul.mubr.bf16.gmra.mrb[0].mxu0 %v403
        %v1210 = vpop.f32.mrb[0].mxu0
        %v1211 = vadd.f32 %v1170, %v1210
        %v1212 = vpop.f32.mrb[0].mxu0
        %v1213 = vadd.f32 %v1172, %v1212
        %v1214 = vpop.f32.mrb[0].mxu0
        %v1215 = vpop.f32.mrb[0].mxu0
        %1216 = vdwg.mxu0
        %v1217 = vpack.c.bf16 %v1211, %v1211
        %v1218 = vpack.c.bf16 %v1213, %v1213
        %v1219 = vtanh.bf16.pop %v1217
        %v1220 = vtanh.bf16.pop %v1218
        %v1221 = vld [vmem:[%s3] sm:$0xf]
        %v1222 = vld [vmem:[%s3 + $0x4] sm:$0xf]
        %v1223 = vld [vmem:[%s3 + $0x8] sm:$0xf]
        %v1224 = vld [vmem:[%s3 + $0xc] sm:$0xf]
        %v1225 = vld [vmem:[%s3 + $0x10] sm:$0xf]
        %v1226 = vld [vmem:[%s3 + $0x14] sm:$0xf]
        %v1227 = vld [vmem:[%s3 + $0x18] sm:$0xf]
        %v1228 = vld [vmem:[%s3 + $0x1c] sm:$0xf]
        %v1229 = vld [vmem:[%s3 + $0x20] sm:$0xf]
        %v1230 = vld [vmem:[%s3 + $0x24] sm:$0xf]
        %v1231 = vld [vmem:[%s3 + $0x28] sm:$0xf]
        %v1232 = vld [vmem:[%s3 + $0x2c] sm:$0xf]
        %v1233 = vld [vmem:[%s3 + $0x30] sm:$0xf]
        %v1234 = vld [vmem:[%s3 + $0x34] sm:$0xf]
        %v1235 = vld [vmem:[%s3 + $0x38] sm:$0xf]
        %v1236 = vld [vmem:[%s3 + $0x3c] sm:$0xf]
        %v1237 = vld [vmem:[%s3 + $0x40] sm:$0xf]
        %v1238 = vld [vmem:[%s3 + $0x44] sm:$0xf]
        %v1239 = vld [vmem:[%s3 + $0x48] sm:$0xf]
        %v1240 = vld [vmem:[%s3 + $0x4c] sm:$0xf]
        %v1241 = vld [vmem:[%s3 + $0x50] sm:$0xf]
        %v1242 = vld [vmem:[%s3 + $0x54] sm:$0xf]
        %v1243 = vld [vmem:[%s3 + $0x58] sm:$0xf]
        %v1244 = vld [vmem:[%s3 + $0x5c] sm:$0xf]
        %v1245 = vld [vmem:[%s3 + $0x60] sm:$0xf]
        %v1246 = vld [vmem:[%s3 + $0x64] sm:$0xf]
        %v1247 = vld [vmem:[%s3 + $0x68] sm:$0xf]
        %v1248 = vld [vmem:[%s3 + $0x6c] sm:$0xf]
        %v1249 = vld [vmem:[%s3 + $0x70] sm:$0xf]
        %v1250 = vld [vmem:[%s3 + $0x74] sm:$0xf]
        %v1251 = vld [vmem:[%s3 + $0x78] sm:$0xf]
        %v1252 = vld [vmem:[%s3 + $0x7c] sm:$0xf]
        %v1253 = vld [vmem:[#allocation2] sm:$0x1]
        %v1255 = vlaneseq
        %v1256 = vshrl.u32 %v1255, 7
        %v1257 = vsub.s32 0, %v1256
        %v1258 = vrot.slane %v1253, %v1257
        %v1292 = vunpack.c.l.b16 %v1221
        %v1293 = vunpack.c.l.b16 %v1222
        %v1294 = vunpack.c.l.b16 %v1223
        %v1295 = vunpack.c.l.b16 %v1224
        %v1296 = vunpack.c.l.b16 %v1225
        %v1297 = vunpack.c.l.b16 %v1226
        %v1298 = vunpack.c.l.b16 %v1227
        %v1299 = vunpack.c.l.b16 %v1228
        %v1300 = vunpack.c.l.b16 %v1229
        %v1301 = vunpack.c.l.b16 %v1230
        %v1302 = vunpack.c.l.b16 %v1231
        %v1303 = vunpack.c.l.b16 %v1232
        %v1304 = vunpack.c.l.b16 %v1233
        %v1305 = vunpack.c.l.b16 %v1234
        %v1306 = vunpack.c.l.b16 %v1235
        %v1307 = vunpack.c.l.b16 %v1236
        %v1308 = vunpack.c.l.b16 %v1237
        %v1309 = vunpack.c.l.b16 %v1238
        %v1310 = vunpack.c.l.b16 %v1239
        %v1311 = vunpack.c.l.b16 %v1240
        %v1312 = vunpack.c.l.b16 %v1241
        %v1313 = vunpack.c.l.b16 %v1242
        %v1314 = vunpack.c.l.b16 %v1243
        %v1315 = vunpack.c.l.b16 %v1244
        %v1316 = vunpack.c.l.b16 %v1245
        %v1317 = vunpack.c.l.b16 %v1246
        %v1318 = vunpack.c.l.b16 %v1247
        %v1319 = vunpack.c.l.b16 %v1248
        %v1320 = vunpack.c.l.b16 %v1249
        %v1321 = vunpack.c.l.b16 %v1250
        %v1322 = vunpack.c.l.b16 %v1251
        %v1323 = vunpack.c.l.b16 %v1252
        %v1324 = vpack.c.b16 %v1293, %v1292
        %v1325 = vpack.c.b16 %v1295, %v1294
        %v1326 = vpack.c.b16 %v1297, %v1296
        %v1327 = vpack.c.b16 %v1299, %v1298
        %v1328 = vpack.c.b16 %v1301, %v1300
        %v1329 = vpack.c.b16 %v1303, %v1302
        %v1330 = vpack.c.b16 %v1305, %v1304
        %v1331 = vpack.c.b16 %v1307, %v1306
        %v1332 = vpack.c.b16 %v1309, %v1308
        %v1333 = vpack.c.b16 %v1311, %v1310
        %v1334 = vpack.c.b16 %v1313, %v1312
        %v1335 = vpack.c.b16 %v1315, %v1314
        %v1336 = vpack.c.b16 %v1317, %v1316
        %v1337 = vpack.c.b16 %v1319, %v1318
        %v1338 = vpack.c.b16 %v1321, %v1320
        %v1339 = vpack.c.b16 %v1323, %v1322
        %1356 = vmatprep.subr.bf16.mxu0 0
        %1357 = vmatpush1.bf16.msra.mxu0 %v1324
        %1358 = vmatprep.subr.bf16.mxu0 0
        %1359 = vmatpush1.bf16.msra.mxu0 %v1325
        %1360 = vmatprep.subr.bf16.mxu0 0
        %1361 = vmatpush1.bf16.msra.mxu0 %v1326
        %1362 = vmatprep.subr.bf16.mxu0 0
        %1363 = vmatpush1.bf16.msra.mxu0 %v1327
        %1364 = vmatprep.subr.bf16.mxu0 0
        %1365 = vmatpush1.bf16.msra.mxu0 %v1328
        %1366 = vmatprep.subr.bf16.mxu0 0
        %1367 = vmatpush1.bf16.msra.mxu0 %v1329
        %1368 = vmatprep.subr.bf16.mxu0 0
        %1369 = vmatpush1.bf16.msra.mxu0 %v1330
        %1370 = vmatprep.subr.bf16.mxu0 0
        %1371 = vmatpush1.bf16.msra.mxu0 %v1331
        %1372 = vmatprep.subr.bf16.mxu0 0
        %1373 = vmatpush1.bf16.msra.mxu0 %v1332
        %1374 = vmatprep.subr.bf16.mxu0 0
        %1375 = vmatpush1.bf16.msra.mxu0 %v1333
        %1376 = vmatprep.subr.bf16.mxu0 0
        %1377 = vmatpush1.bf16.msra.mxu0 %v1334
        %1378 = vmatprep.subr.bf16.mxu0 0
        %1379 = vmatpush1.bf16.msra.mxu0 %v1335
        %1380 = vmatprep.subr.bf16.mxu0 0
        %1381 = vmatpush1.bf16.msra.mxu0 %v1336
        %1382 = vmatprep.subr.bf16.mxu0 0
        %1383 = vmatpush1.bf16.msra.mxu0 %v1337
        %1384 = vmatprep.subr.bf16.mxu0 0
        %1385 = vmatpush1.bf16.msra.mxu0 %v1338
        %1386 = vmatprep.subr.bf16.mxu0 0
        %1387 = vmatpush1.bf16.msra.mxu0 %v1339
        %1388 = vmatprep.mubr.bf16.mxu0 %v1220
        %1389 = vmatmul.mubr.bf16.gmra.mrb[0].mxu0 %v1219
        %v1390 = vpop.f32.mrb[0].mxu0
        %v1391 = vadd.f32 %v1258, %v1390
        %v1392 = vpop.f32.mrb[0].mxu0
        %v1393 = vpop.f32.mrb[0].mxu0
        %v1394 = vpop.f32.mrb[0].mxu0
        %1395 = vdwg.mxu0
        %vm1396 = vcmask 7168
        %1397 = vst.msk [vmem:[%s239] sm:$0xff] %vm1396, %v1391
        %p1398 = scmp.lt.s32.totalorder %s19, 1
        %s1399 = scalar_select %p1398, %s19, 1
        %s1400 = smul.addr %s1399, 8
        %s1401 = scalar_lea.vmem %s5, %s1400
        // Predicated region
        $region45: #{tpu_custom_call.1} parent=39 // pred_check
          %p1402 = pneg %p147
        $region46: #{tpu_custom_call.1} parent=39 // pred_check_branch
          %1404 = sbr.rel (%p1402) target = $region48
        $region47: #{tpu_custom_call.1} parent=39 // pred_region
          _
        $region48: #{tpu_custom_call.1} parent=39 // pred_fallthru
          _
      $region40: #{tpu_custom_call.1} parent=5 // pred_fallthru
        _
      %p1405 = scmp.le.s32.totalorder 2, %s14
      // Predicated region
      $region49: #{tpu_custom_call.1} parent=5 // pred_check
        %p1406 = pneg %p1405
      $region50: #{tpu_custom_call.1} parent=5 // pred_check_branch
        %1408 = sbr.rel (%p1406) target = $region52
      $region51: #{tpu_custom_call.1} parent=5 // pred_region
        %s1409 = ssub.s32 %s14, 2
        // Predicated region
        $region53: #{tpu_custom_call.1} parent=51 // pred_check
          %p1410 = pneg %p153
        $region54: #{tpu_custom_call.1} parent=51 // pred_check_branch
          %1412 = sbr.rel (%p1410) target = $region56
        $region55: #{tpu_custom_call.1} parent=51 // pred_region
          %p1413 = scmp.lt.s32.totalorder %s20, 1
          %s1414 = scalar_select %p1413, %s20, 1
          %s1415 = smul.addr %s1414, 8
          %s1416 = scalar_lea.vmem %s5, %s1415
        $region56: #{tpu_custom_call.1} parent=51 // pred_fallthru
          _
      $region52: #{tpu_custom_call.1} parent=5 // pred_fallthru
        _
    $region6: #{tpu_custom_call.1} parent=1 // loop_footer
      %s18 = sadd.s32 1, %s14
    $region7: #{tpu_custom_call.1} parent=1 // loop_footer_branch
      %13 = sbr.rel target = $region3
    $region8: #{tpu_custom_call.1} parent=1 // loop_exit
      _
    %1417 = vsyncpa [#allocation4], 1
    %s1418 = scalar_lea.sflag [#allocation4], 1
    %1419 = vsyncpa %s1418, 1

</llo_original>
